<compile_context>
chip_gen: v6e
topology: v6e:2x2x1
jax: 0.10.0
libtpu: 0.0.40
codegen_flags: <defaults>
</compile_context>

<pallas_src>
import functools

import jax
import jax.numpy as jnp
from jax import lax
from jax.experimental import pallas as pl
from jax.experimental.pallas import tpu as pltpu


_NEG = -3.0e38                                # finite "-inf" sentinel
_DN_T = (((1,), (1,)), ((), ()))              # contract last dims of both operands


def _similarity_topk_kernel(
    x_ref, t_ref,                 # (B_pad, TK) full-row D chunks (compute dtype)
    n2x_row_ref, n2t_row_ref,     # (TM, 1) f32 squared norms of this row block
    n2x_col_ref, n2t_col_ref,     # (1, B_pad) f32 squared norms of all rows
    err_ref,                      # (TM, 1) f32 output: per-row partial sq. error
    sim_o_ref, sim_t_ref,         # (TM, B_pad) f32 scratch slabs
    *, batch, k, tm,
):
    f32 = jnp.float32
    # Bind all grid queries at the top level (never inside pl.when bodies).
    i = pl.program_id(0)          # row block
    kc = pl.program_id(1)         # D chunk
    nkc = pl.num_programs(1)
    row0 = i * tm

    # Row block sliced from the full-row chunk (no duplicate DMA of those rows).
    xb = x_ref[pl.ds(row0, tm), :]
    tb = t_ref[pl.ds(row0, tm), :]

    # Gram contribution of this D chunk: native dtype into the MXU (A @ B.T via
    # dot_general contracting the last axes -> no transpose), f32 accumulation.
    prod_o = lax.dot_general(xb, x_ref[...], _DN_T, preferred_element_type=f32)
    prod_t = lax.dot_general(tb, t_ref[...], _DN_T, preferred_element_type=f32)

    @pl.when(kc == 0)
    def _first():
        sim_o_ref[...] = prod_o
        sim_t_ref[...] = prod_t

    @pl.when(kc != 0)
    def _accum():
        sim_o_ref[...] += prod_o
        sim_t_ref[...] += prod_t

    @pl.when(kc == nkc - 1)
    def _finish():
        tm_b, bp = sim_o_ref.shape
        neg = f32(_NEG)
        eps2 = f32(1e-8)

        inv_xr = lax.rsqrt(jnp.maximum(n2x_row_ref[...], eps2))   # (TM, 1)
        inv_tr = lax.rsqrt(jnp.maximum(n2t_row_ref[...], eps2))
        inv_xc = lax.rsqrt(jnp.maximum(n2x_col_ref[...], eps2))   # (1, B_pad)
        inv_tc = lax.rsqrt(jnp.maximum(n2t_col_ref[...], eps2))

        col = lax.broadcasted_iota(jnp.int32, (tm_b, bp), 1)
        row = row0 + lax.broadcasted_iota(jnp.int32, (tm_b, bp), 0)
        invalid = (col == row) | (col >= batch)                    # diag + padded cols

        # Normalize once; sim_o is loop-invariant, sim_t is carried in-loop.
        so = jnp.where(invalid, neg, sim_o_ref[...] * inv_xr * inv_xc)
        st0 = jnp.where(invalid, neg, sim_t_ref[...] * inv_tr * inv_tc)

        def body(_, carry):
            st, err = carry
            rowmax = jnp.max(st, axis=-1, keepdims=True)           # (TM, 1)
            # first-occurrence tie-break, like torch.topk
            idx = jnp.min(jnp.where(st == rowmax, col, bp), axis=-1, keepdims=True)
            sel = col == idx
            live = rowmax > f32(0.5) * neg                         # row not exhausted
            diff = jnp.where(sel & live, so - rowmax, f32(0.0))
            err = err + jnp.sum(diff * diff, axis=-1, keepdims=True)
            st = jnp.where(sel, neg, st)                           # remove selected
            return st, err

        _, err = lax.fori_loop(0, k, body, (st0, jnp.zeros((tm_b, 1), f32)))
        err_ref[...] = err


def _round_up(a, m):
    return (a + m - 1) // m * m


def similarity_loss_topk(model_output, targets, weight=1.0, k=10, compute_dtype=None):
    model_output = jnp.asarray(model_output)
    targets = jnp.asarray(targets)
    B, D = model_output.shape
    # PyTorch branch: if s < self.k: self.k = 5  (treated per call, stateless)
    k_eff = k if B >= k else 5

    # Chip VMEM (v7x 64 MiB, v5e/v6e 128 MiB); conservative fallback off-TPU.
    try:
        vmem_cap = int(pltpu.get_tpu_info().vmem_capacity_bytes)
    except Exception:
        vmem_cap = 64 * 1024 * 1024
    small_vmem = vmem_cap <= 64 * 1024 * 1024
    budget = int(0.8 * vmem_cap)

    # bf16 streaming (f32 accumulation in-kernel) when the HBM traffic matters.
    if compute_dtype is None:
        if model_output.dtype == jnp.bfloat16 or B >= 512:
            compute_dtype = jnp.bfloat16
        else:
            compute_dtype = model_output.dtype
    itemsize = jnp.dtype(compute_dtype).itemsize

    # Row-block size: generation-aware; keep >= 2 row blocks when B > 128 so the
    # "parallel" axis shards across both v7x TensorCores.
    if B <= 128:
        TM = _round_up(B, 8)
    elif B <= 256:
        TM = 128
    else:
        TM = 256 if small_vmem else 512
    B_pad = _round_up(B, TM)
    while TM > 64 and 2 * TM * B_pad * 4 > 0.4 * vmem_cap:   # keep slabs well inside VMEM
        TM //= 2
        B_pad = _round_up(B, TM)
    G = B_pad // TM

    # D padding: round to 128 (waste < 128 cols); TK = largest {512,384,256,128}
    # divisor of D_pad that keeps the double-buffered full-row chunks in budget.
    D_pad = _round_up(max(D, 1), 128)
    TK = 128
    for cand in (512, 384, 256, 128):
        if D_pad % cand == 0:
            TK = cand
            break
    while TK > 128 and (4 * B_pad * TK * itemsize + 2 * TM * B_pad * 4) > budget:
        smaller = [c for c in (384, 256, 128) if c < TK and D_pad % c == 0]
        TK = smaller[0] if smaller else 128
    KC = D_pad // TK

    x = jnp.pad(model_output, ((0, B_pad - B), (0, D_pad - D))).astype(compute_dtype)
    t = jnp.pad(targets, ((0, B_pad - B), (0, D_pad - D))).astype(compute_dtype)

    # Per-row squared norms, computed once (padded rows -> 0, masked in-kernel).
    xf = x.astype(jnp.float32)
    tf = t.astype(jnp.float32)
    n2x = jnp.sum(xf * xf, axis=-1)
    n2t = jnp.sum(tf * tf, axis=-1)
    n2x_row, n2t_row = n2x[:, None], n2t[:, None]        # (B_pad, 1)
    n2x_col, n2t_col = n2x[None, :], n2t[None, :]        # (1, B_pad)

    # Scoped VMEM sized to the working set (slabs + epilogue temps + chunk buffers).
    need = (2 * TM * B_pad * 4                # similarity slabs
            + 4 * TM * B_pad * 4              # epilogue temporaries / loop carry
            + 4 * B_pad * TK * itemsize       # double-buffered x/t chunks
            + 8 * B_pad * 4                   # norm inputs
            + 4 * TM * 4)
    vmem_limit = int(min(max(int(1.25 * need), 16 * 1024 * 1024), budget))

    kern = functools.partial(_similarity_topk_kernel, batch=B, k=k_eff, tm=TM)

    err = pl.pallas_call(
        kern,
        out_shape=jax.ShapeDtypeStruct((B_pad, 1), jnp.float32),
        grid_spec=pltpu.PrefetchScalarGridSpec(
            num_scalar_prefetch=0,
            grid=(G, KC),
            in_specs=[
                pl.BlockSpec((B_pad, TK), lambda i, kc: (0, kc)),   # model_output, all rows (D chunk)
                pl.BlockSpec((B_pad, TK), lambda i, kc: (0, kc)),   # targets, all rows (D chunk)
                pl.BlockSpec((TM, 1), lambda i, kc: (i, 0)),        # ||x||^2 row block
                pl.BlockSpec((TM, 1), lambda i, kc: (i, 0)),        # ||t||^2 row block
                pl.BlockSpec((1, B_pad), lambda i, kc: (0, 0)),     # ||x||^2 columns
                pl.BlockSpec((1, B_pad), lambda i, kc: (0, 0)),     # ||t||^2 columns
            ],
            out_specs=pl.BlockSpec((TM, 1), lambda i, kc: (i, 0)),
            scratch_shapes=[
                pltpu.VMEM((TM, B_pad), jnp.float32),  # sim_outputs slab
                pltpu.VMEM((TM, B_pad), jnp.float32),  # sim_targets slab
            ],
        ),
        compiler_params=pltpu.CompilerParams(
            dimension_semantics=("parallel", "arbitrary"),
            vmem_limit_bytes=vmem_limit,
        ),
    )(x, t, n2x_row, n2t_row, n2x_col, n2t_col)

    return jnp.float32(weight) * jnp.sum(err) / jnp.float32(B * k_eff)


def _reference(model_output, targets, weight=1.0, k=10):
    # Plain-JAX reference faithful to the PyTorch module.
    B = model_output.shape[0]
    k_eff = k if B >= k else 5

    def cos_mat(a):
        a = a.astype(jnp.float32)
        n2 = jnp.sum(a * a, axis=-1, keepdims=True)
        g = jnp.dot(a, a.T, precision=lax.Precision.HIGHEST)
        return g / jnp.sqrt(jnp.maximum(n2 * n2.T, 1e-16))

    sim_o = cos_mat(model_output)
    sim_t = cos_mat(targets)
    mask = jnp.eye(B, dtype=bool)
    sim_o = jnp.where(mask, -jnp.inf, sim_o)
    sim_t = jnp.where(mask, -jnp.inf, sim_t)
    topv, topi = lax.top_k(sim_t, k_eff)
    topo = jnp.take_along_axis(sim_o, topi, axis=1)
    return weight * jnp.mean((topo - topv) ** 2)


if __name__ == "__main__":
    key = jax.random.PRNGKey(0)
    k1, k2 = jax.random.split(key)
    B, D = 8, 32
    model_output = jax.random.normal(k1, (B, D), dtype=jnp.float32)
    targets = jax.random.normal(k2, (B, D), dtype=jnp.float32)

    loss = similarity_loss_topk(model_output, targets, weight=1.0, k=10)
    jax.block_until_ready(loss)

    ref = _reference(model_output, targets, weight=1.0, k=10)
    assert jnp.allclose(loss, ref, rtol=1e-3, atol=1e-5), (loss, ref)

    print("KERNEL_OK")
</pallas_src>

<mosaic_0001>
module attributes {stable_mosaic.version = 11 : i64} {
  func.func @_similarity_topk_kernel(%arg0: i32, %arg1: i32, %arg2: memref<8x128xf32, #tpu.memory_space<vmem>>, %arg3: memref<8x128xf32, #tpu.memory_space<vmem>>, %arg4: memref<8x1xf32, #tpu.memory_space<vmem>>, %arg5: memref<8x1xf32, #tpu.memory_space<vmem>>, %arg6: memref<1x8xf32, #tpu.memory_space<vmem>>, %arg7: memref<1x8xf32, #tpu.memory_space<vmem>>, %arg8: memref<8x1xf32, #tpu.memory_space<vmem>>, %arg9: memref<8x8xf32, #tpu.memory_space<vmem>>, %arg10: memref<8x8xf32, #tpu.memory_space<vmem>>) attributes {dimension_semantics = [#tpu.dimension_semantics<parallel>, #tpu.dimension_semantics<arbitrary>], iteration_bounds = array<i64: 1, 1>, scalar_prefetch = 0 : i64, scratch_operands = 2 : i64, tpu.core_type = #tpu.core_type<tc>, window_params = [{transform_indices = @transform_0, window_bounds = array<i64: 8, 128>}, {transform_indices = @transform_1, window_bounds = array<i64: 8, 128>}, {transform_indices = @transform_2, window_bounds = array<i64: 8, 1>}, {transform_indices = @transform_3, window_bounds = array<i64: 8, 1>}, {pipeline_mode = #tpu.pipeline_mode<synchronous>, transform_indices = @transform_4, window_bounds = array<i64: 1, 8>}, {pipeline_mode = #tpu.pipeline_mode<synchronous>, transform_indices = @transform_5, window_bounds = array<i64: 1, 8>}, {transform_indices = @transform_6, window_bounds = array<i64: 8, 1>}]} {
    %c8_i32 = arith.constant 8 : i32
    %0 = arith.muli %arg0, %c8_i32 : i32
    %1 = arith.index_cast %0 : i32 to index
    %c0 = arith.constant 0 : index
    %2 = vector.load %arg2[%1, %c0] : memref<8x128xf32, #tpu.memory_space<vmem>>, vector<8x128xf32>
    %3 = arith.index_cast %0 : i32 to index
    %c0_0 = arith.constant 0 : index
    %4 = vector.load %arg3[%3, %c0_0] : memref<8x128xf32, #tpu.memory_space<vmem>>, vector<8x128xf32>
    %c0_1 = arith.constant 0 : index
    %c0_2 = arith.constant 0 : index
    %5 = vector.load %arg2[%c0_1, %c0_2] : memref<8x128xf32, #tpu.memory_space<vmem>>, vector<8x128xf32>
    %cst = arith.constant dense<0.000000e+00> : vector<8x8xf32>
    %6 = tpu.matmul %2, %5, %cst {dimension_numbers = #tpu.dot_dimension_numbers<[1], [1], [0], [0], [0, 0, 1, 0], [], []>} : vector<8x128xf32>, vector<8x128xf32>, vector<8x8xf32> -> vector<8x8xf32>
    %c0_3 = arith.constant 0 : index
    %c0_4 = arith.constant 0 : index
    %7 = vector.load %arg3[%c0_3, %c0_4] : memref<8x128xf32, #tpu.memory_space<vmem>>, vector<8x128xf32>
    %cst_5 = arith.constant dense<0.000000e+00> : vector<8x8xf32>
    %8 = tpu.matmul %4, %7, %cst_5 {dimension_numbers = #tpu.dot_dimension_numbers<[1], [1], [0], [0], [0, 0, 1, 0], [], []>} : vector<8x128xf32>, vector<8x128xf32>, vector<8x8xf32> -> vector<8x8xf32>
    %c0_i32 = arith.constant 0 : i32
    %9 = arith.cmpi eq, %arg1, %c0_i32 : i32
    %10 = arith.extui %9 : i1 to i32
    %c0_i32_6 = arith.constant 0 : i32
    %11 = arith.cmpi ne, %10, %c0_i32_6 : i32
    scf.if %11 {
      %c0_11 = arith.constant 0 : index
      %c0_12 = arith.constant 0 : index
      %18 = vector.load %arg9[%c0_11, %c0_12] : memref<8x8xf32, #tpu.memory_space<vmem>>, vector<8x8xf32>
      tpu.vector_store %arg9[%c0_11, %c0_12], %6 {strides = array<i32>} : memref<8x8xf32, #tpu.memory_space<vmem>>, vector<8x8xf32>,
      %c0_13 = arith.constant 0 : index
      %c0_14 = arith.constant 0 : index
      %19 = vector.load %arg10[%c0_13, %c0_14] : memref<8x8xf32, #tpu.memory_space<vmem>>, vector<8x8xf32>
      tpu.vector_store %arg10[%c0_13, %c0_14], %8 {strides = array<i32>} : memref<8x8xf32, #tpu.memory_space<vmem>>, vector<8x8xf32>,
    } else {
    }
    %c0_i32_7 = arith.constant 0 : i32
    %12 = arith.cmpi ne, %arg1, %c0_i32_7 : i32
    %13 = arith.extui %12 : i1 to i32
    %c0_i32_8 = arith.constant 0 : i32
    %14 = arith.cmpi ne, %13, %c0_i32_8 : i32
    scf.if %14 {
      %c0_11 = arith.constant 0 : index
      %c0_12 = arith.constant 0 : index
      %18 = vector.load %arg9[%c0_11, %c0_12] : memref<8x8xf32, #tpu.memory_space<vmem>>, vector<8x8xf32>
      %19 = arith.addf %18, %6 : vector<8x8xf32>
      %c0_13 = arith.constant 0 : index
      %c0_14 = arith.constant 0 : index
      %20 = vector.load %arg9[%c0_13, %c0_14] : memref<8x8xf32, #tpu.memory_space<vmem>>, vector<8x8xf32>
      tpu.vector_store %arg9[%c0_13, %c0_14], %19 {strides = array<i32>} : memref<8x8xf32, #tpu.memory_space<vmem>>, vector<8x8xf32>,
      %c0_15 = arith.constant 0 : index
      %c0_16 = arith.constant 0 : index
      %21 = vector.load %arg10[%c0_15, %c0_16] : memref<8x8xf32, #tpu.memory_space<vmem>>, vector<8x8xf32>
      %22 = arith.addf %21, %8 : vector<8x8xf32>
      %c0_17 = arith.constant 0 : index
      %c0_18 = arith.constant 0 : index
      %23 = vector.load %arg10[%c0_17, %c0_18] : memref<8x8xf32, #tpu.memory_space<vmem>>, vector<8x8xf32>
      tpu.vector_store %arg10[%c0_17, %c0_18], %22 {strides = array<i32>} : memref<8x8xf32, #tpu.memory_space<vmem>>, vector<8x8xf32>,
    } else {
    }
    %c0_i32_9 = arith.constant 0 : i32
    %15 = arith.cmpi eq, %arg1, %c0_i32_9 : i32
    %16 = arith.extui %15 : i1 to i32
    %c0_i32_10 = arith.constant 0 : i32
    %17 = arith.cmpi ne, %16, %c0_i32_10 : i32
    scf.if %17 {
      %c0_11 = arith.constant 0 : index
      %c0_12 = arith.constant 0 : index
      %18 = vector.load %arg4[%c0_11, %c0_12] : memref<8x1xf32, #tpu.memory_space<vmem>>, vector<8x1xf32>
      %cst_13 = arith.constant 9.99999993E-9 : f32
      %19 = vector.broadcast %cst_13 : f32 to vector<8x1xf32>
      %20 = arith.maximumf %18, %19 : vector<8x1xf32>
      %21 = math.rsqrt %20 : vector<8x1xf32>
      %c0_14 = arith.constant 0 : index
      %c0_15 = arith.constant 0 : index
      %22 = vector.load %arg5[%c0_14, %c0_15] : memref<8x1xf32, #tpu.memory_space<vmem>>, vector<8x1xf32>
      %cst_16 = arith.constant 9.99999993E-9 : f32
      %23 = vector.broadcast %cst_16 : f32 to vector<8x1xf32>
      %24 = arith.maximumf %22, %23 : vector<8x1xf32>
      %25 = math.rsqrt %24 : vector<8x1xf32>
      %c0_17 = arith.constant 0 : index
      %c0_18 = arith.constant 0 : index
      %26 = vector.load %arg6[%c0_17, %c0_18] : memref<1x8xf32, #tpu.memory_space<vmem>>, vector<1x8xf32>
      %cst_19 = arith.constant 9.99999993E-9 : f32
      %27 = vector.broadcast %cst_19 : f32 to vector<1x8xf32>
      %28 = arith.maximumf %26, %27 : vector<1x8xf32>
      %29 = math.rsqrt %28 : vector<1x8xf32>
      %c0_20 = arith.constant 0 : index
      %c0_21 = arith.constant 0 : index
      %30 = vector.load %arg7[%c0_20, %c0_21] : memref<1x8xf32, #tpu.memory_space<vmem>>, vector<1x8xf32>
      %cst_22 = arith.constant 9.99999993E-9 : f32
      %31 = vector.broadcast %cst_22 : f32 to vector<1x8xf32>
      %32 = arith.maximumf %30, %31 : vector<1x8xf32>
      %33 = math.rsqrt %32 : vector<1x8xf32>
      %34 = tpu.iota {dimensions = array<i32: 1>} : vector<8x8xi32>
      %35 = tpu.iota {dimensions = array<i32: 0>} : vector<8x8xi32>
      %36 = vector.broadcast %0 : i32 to vector<8x8xi32>
      %37 = arith.addi %36, %35 : vector<8x8xi32>
      %38 = arith.cmpi eq, %34, %37 : vector<8x8xi32>
      %c8_i32_23 = arith.constant 8 : i32
      %39 = vector.broadcast %c8_i32_23 : i32 to vector<8x8xi32>
      %40 = arith.cmpi sge, %34, %39 : vector<8x8xi32>
      %41 = arith.ori %38, %40 : vector<8x8xi1>
      %c0_24 = arith.constant 0 : index
      %c0_25 = arith.constant 0 : index
      %42 = vector.load %arg9[%c0_24, %c0_25] : memref<8x8xf32, #tpu.memory_space<vmem>>, vector<8x8xf32>
      %43 = vector.broadcast %21 : vector<8x1xf32> to vector<8x8xf32>
      %44 = arith.mulf %42, %43 : vector<8x8xf32>
      %45 = vector.broadcast %29 : vector<1x8xf32> to vector<8x8xf32>
      %46 = arith.mulf %44, %45 : vector<8x8xf32>
      %cst_26 = arith.constant -3.000000e+38 : f32
      %47 = vector.broadcast %cst_26 : f32 to vector<8x8xf32>
      %48 = arith.select %41, %47, %46 : vector<8x8xi1>, vector<8x8xf32>
      %c0_27 = arith.constant 0 : index
      %c0_28 = arith.constant 0 : index
      %49 = vector.load %arg10[%c0_27, %c0_28] : memref<8x8xf32, #tpu.memory_space<vmem>>, vector<8x8xf32>
      %50 = vector.broadcast %25 : vector<8x1xf32> to vector<8x8xf32>
      %51 = arith.mulf %49, %50 : vector<8x8xf32>
      %52 = vector.broadcast %33 : vector<1x8xf32> to vector<8x8xf32>
      %53 = arith.mulf %51, %52 : vector<8x8xf32>
      %cst_29 = arith.constant -3.000000e+38 : f32
      %54 = vector.broadcast %cst_29 : f32 to vector<8x8xf32>
      %55 = arith.select %41, %54, %53 : vector<8x8xi1>, vector<8x8xf32>
      %cst_30 = arith.constant 0.000000e+00 : f32
      %56 = vector.broadcast %cst_30 : f32 to vector<8x1xf32>
      %cst_31 = arith.constant -3.000000e+38 : f32
      %c0_i32_32 = arith.constant 0 : i32
      %c5_i32 = arith.constant 5 : i32
      %57 = arith.addi %c0_i32_32, %c5_i32 : i32
      %c1_i32 = arith.constant 1 : i32
      %58:2 = scf.for %arg11 = %c0_i32_32 to %57 step %c1_i32 iter_args(%arg12 = %55, %arg13 = %56) -> (vector<8x8xf32>, vector<8x1xf32>)  : i32 {
        %cst_35 = arith.constant dense<0xFF800000> : vector<8xf32>
        %60 = vector.multi_reduction <maximumf>, %arg12, %cst_35 [1] : vector<8x8xf32> to vector<8xf32>
        %61 = vector.shape_cast %60 : vector<8xf32> to vector<8x1xf32>
        %62 = vector.broadcast %61 : vector<8x1xf32> to vector<8x8xf32>
        %63 = arith.cmpf oeq, %arg12, %62 : vector<8x8xf32>
        %c8_i32_36 = arith.constant 8 : i32
        %64 = vector.broadcast %c8_i32_36 : i32 to vector<8x8xi32>
        %65 = arith.select %63, %34, %64 : vector<8x8xi1>, vector<8x8xi32>
        %cst_37 = arith.constant dense<2147483647> : vector<8xi32>
        %66 = vector.multi_reduction <minsi>, %65, %cst_37 [1] : vector<8x8xi32> to vector<8xi32>
        %67 = vector.shape_cast %66 : vector<8xi32> to vector<8x1xi32>
        %68 = vector.broadcast %67 : vector<8x1xi32> to vector<8x8xi32>
        %69 = arith.cmpi eq, %34, %68 : vector<8x8xi32>
        %cst_38 = arith.constant 5.000000e-01 : f32
        %70 = arith.mulf %cst_38, %cst_31 : f32
        %71 = vector.broadcast %70 : f32 to vector<8x1xf32>
        %72 = arith.cmpf ogt, %61, %71 : vector<8x1xf32>
        %73 = vector.broadcast %72 : vector<8x1xi1> to vector<8x8xi1>
        %74 = arith.andi %69, %73 : vector<8x8xi1>
        %75 = vector.broadcast %61 : vector<8x1xf32> to vector<8x8xf32>
        %76 = arith.subf %48, %75 : vector<8x8xf32>
        %cst_39 = arith.constant 0.000000e+00 : f32
        %77 = vector.broadcast %cst_39 : f32 to vector<8x8xf32>
        %78 = arith.select %74, %76, %77 : vector<8x8xi1>, vector<8x8xf32>
        %79 = arith.mulf %78, %78 : vector<8x8xf32>
        %cst_40 = arith.constant dense<0.000000e+00> : vector<8xf32>
        %80 = vector.multi_reduction <add>, %79, %cst_40 [1] : vector<8x8xf32> to vector<8xf32>
        %81 = vector.shape_cast %80 : vector<8xf32> to vector<8x1xf32>
        %82 = arith.addf %arg13, %81 : vector<8x1xf32>
        %83 = vector.broadcast %cst_31 : f32 to vector<8x8xf32>
        %84 = arith.select %69, %83, %arg12 : vector<8x8xi1>, vector<8x8xf32>
        scf.yield %84, %82 : vector<8x8xf32>, vector<8x1xf32>
      }
      %c0_33 = arith.constant 0 : index
      %c0_34 = arith.constant 0 : index
      %59 = vector.load %arg8[%c0_33, %c0_34] : memref<8x1xf32, #tpu.memory_space<vmem>>, vector<8x1xf32>
      tpu.vector_store %arg8[%c0_33, %c0_34], %58#1 {strides = array<i32>} : memref<8x1xf32, #tpu.memory_space<vmem>>, vector<8x1xf32>,
    } else {
    }
    return
  }
  func.func @transform_0(%arg0: i32, %arg1: i32) -> (i32, i32) {
    %c0_i32 = arith.constant 0 : i32
    %c0_i32_0 = arith.constant 0 : i32
    return %c0_i32, %arg1 : i32, i32
  }
  func.func @transform_1(%arg0: i32, %arg1: i32) -> (i32, i32) {
    %c0_i32 = arith.constant 0 : i32
    %c0_i32_0 = arith.constant 0 : i32
    return %c0_i32, %arg1 : i32, i32
  }
  func.func @transform_2(%arg0: i32, %arg1: i32) -> (i32, i32) {
    %c0_i32 = arith.constant 0 : i32
    %c0_i32_0 = arith.constant 0 : i32
    return %arg0, %c0_i32 : i32, i32
  }
  func.func @transform_3(%arg0: i32, %arg1: i32) -> (i32, i32) {
    %c0_i32 = arith.constant 0 : i32
    %c0_i32_0 = arith.constant 0 : i32
    return %arg0, %c0_i32 : i32, i32
  }
  func.func @transform_4(%arg0: i32, %arg1: i32) -> (i32, i32) {
    %c0_i32 = arith.constant 0 : i32
    %c0_i32_0 = arith.constant 0 : i32
    %c0_i32_1 = arith.constant 0 : i32
    return %c0_i32, %c0_i32_0 : i32, i32
  }
  func.func @transform_5(%arg0: i32, %arg1: i32) -> (i32, i32) {
    %c0_i32 = arith.constant 0 : i32
    %c0_i32_0 = arith.constant 0 : i32
    %c0_i32_1 = arith.constant 0 : i32
    return %c0_i32, %c0_i32_0 : i32, i32
  }
  func.func @transform_6(%arg0: i32, %arg1: i32) -> (i32, i32) {
    %c0_i32 = arith.constant 0 : i32
    %c0_i32_0 = arith.constant 0 : i32
    return %arg0, %c0_i32 : i32, i32
  }
}

</mosaic_0001>

<llo_original>
// kernel: tpu_custom_call.1
$region0: #{tpu_custom_call.1}
  #allocation0 [shape = 'u32[]', space=smem, size = 0x4, offset = 0x4, fixed_abs, tag = 'smem constant byte address 0x4 - core index']
  #allocation1 [shape = 'u32[144,128]{1,0:T(1,128)}', space=vmem, size = 0x12000, scoped, tag = 'internal scratch']
  #allocation2 [shape = 'f32[8,8]{1,0:T(8,128)}', space=vmem, size = 0x1000, scoped, tag = 'scratch operand']
  #allocation3 [shape = 'f32[8,8]{1,0:T(8,128)}', space=vmem, size = 0x1000, scoped, tag = 'scratch operand']
  %s0 = inlined_call_operand.vmem [shape: f32[8,128], index: 0, kind: input, shape index: {}]
  %s1 = inlined_call_operand.vmem [shape: f32[8,128], index: 1, kind: input, shape index: {}]
  %s2 = inlined_call_operand.vmem [shape: f32[8,1], index: 2, kind: input, shape index: {}]
  %s3 = inlined_call_operand.vmem [shape: f32[8,1], index: 3, kind: input, shape index: {}]
  %s4 = inlined_call_operand.vmem [shape: f32[1,8], index: 4, kind: input, shape index: {}]
  %s5 = inlined_call_operand.vmem [shape: f32[1,8], index: 5, kind: input, shape index: {}]
  %s6 = inlined_call_operand.vmem [shape: f32[8,1], index: 6, kind: output, shape index: {}]
  %s7 = sld [smem:[#allocation0]]
  $region53: #{tpu_custom_call.1} parent=0
    _
  %s9 = ssub.s32 1, %s7
  %s10 = scalar_select 0, %s9, %s7
  // Predicated region
  $region2: #{tpu_custom_call.1} parent=0 // pred_check
    _
  $region3: #{tpu_custom_call.1} parent=0 // pred_check_branch
    %12 = sbr.rel (0) target = $region5
  $region4: #{tpu_custom_call.1} parent=0 // pred_region
    _
  $region5: #{tpu_custom_call.1} parent=0 // pred_fallthru
    _
  // Predicated region
  $region6: #{tpu_custom_call.1} parent=0 // pred_check
    _
  $region7: #{tpu_custom_call.1} parent=0 // pred_check_branch
    %14 = sbr.rel (0) target = $region9
  $region8: #{tpu_custom_call.1} parent=0 // pred_region
    _
  $region9: #{tpu_custom_call.1} parent=0 // pred_fallthru
    _
  // Predicated region
  $region10: #{tpu_custom_call.1} parent=0 // pred_check
    _
  $region11: #{tpu_custom_call.1} parent=0 // pred_check_branch
    %16 = sbr.rel (0) target = $region13
  $region12: #{tpu_custom_call.1} parent=0 // pred_region
    _
  $region13: #{tpu_custom_call.1} parent=0 // pred_fallthru
    _
  // Predicated region
  $region14: #{tpu_custom_call.1} parent=0 // pred_check
    _
  $region15: #{tpu_custom_call.1} parent=0 // pred_check_branch
    %18 = sbr.rel (0) target = $region17
  $region16: #{tpu_custom_call.1} parent=0 // pred_region
    _
  $region17: #{tpu_custom_call.1} parent=0 // pred_fallthru
    _
  // Predicated region
  $region18: #{tpu_custom_call.1} parent=0 // pred_check
    _
  $region19: #{tpu_custom_call.1} parent=0 // pred_check_branch
    %20 = sbr.rel (0) target = $region21
  $region20: #{tpu_custom_call.1} parent=0 // pred_region
    _
  $region21: #{tpu_custom_call.1} parent=0 // pred_fallthru
    _
  // Predicated region
  $region22: #{tpu_custom_call.1} parent=0 // pred_check
    _
  $region23: #{tpu_custom_call.1} parent=0 // pred_check_branch
    %22 = sbr.rel (0) target = $region25
  $region24: #{tpu_custom_call.1} parent=0 // pred_region
    _
  $region25: #{tpu_custom_call.1} parent=0 // pred_fallthru
    _
  %s23 = smul.u32 0, 8
  %s24 = scalar_lea.vmem %s0, %s23
  %v25 = vld [vmem:[%s24] sm:$0xff]
  %s26 = scalar_lea.vmem %s1, %s23
  %v27 = vld [vmem:[%s26] sm:$0xff]
  %v28 = vld [vmem:[%s0] sm:$0xff]
  %29 = vmatprep.subr.mxu0 0.0
  %30 = vmatpush1.xpose.msra.mxu0 0.0
  %31 = vmatprep.subr.mxu0 0.0
  %32 = vmatpush1.xpose.msra.mxu0 0.0
  %33 = vmatprep.subr.mxu0 0.0
  %34 = vmatpush1.xpose.msra.mxu0 0.0
  %35 = vmatprep.subr.mxu0 0.0
  %36 = vmatpush1.xpose.msra.mxu0 0.0
  %37 = vmatprep.subr.mxu0 0.0
  %38 = vmatpush1.xpose.msra.mxu0 0.0
  %39 = vmatprep.subr.mxu0 0.0
  %40 = vmatpush1.xpose.msra.mxu0 0.0
  %41 = vmatprep.subr.mxu0 0.0
  %42 = vmatpush1.xpose.msra.mxu0 0.0
  %43 = vmatprep.subr.mxu0 0.0
  %44 = vmatpush1.xpose.msra.mxu0 0.0
  %45 = vmatprep.subr.mxu0 0.0
  %46 = vmatpush1.xpose.msra.mxu0 0.0
  %47 = vmatprep.subr.mxu0 0.0
  %48 = vmatpush1.xpose.msra.mxu0 0.0
  %49 = vmatprep.subr.mxu0 0.0
  %50 = vmatpush1.xpose.msra.mxu0 0.0
  %51 = vmatprep.subr.mxu0 0.0
  %52 = vmatpush1.xpose.msra.mxu0 0.0
  %53 = vmatprep.subr.mxu0 0.0
  %54 = vmatpush1.xpose.msra.mxu0 0.0
  %55 = vmatprep.subr.mxu0 0.0
  %56 = vmatpush1.xpose.msra.mxu0 0.0
  %57 = vmatprep.subr.mxu0 0.0
  %58 = vmatpush1.xpose.msra.mxu0 0.0
  %59 = vmatprep.subr.mxu0 0.0
  %60 = vmatpush1.xpose.msra.mxu0 %v28
  %61 = vmatprep.subr.mxu0 0.0
  %62 = vmatpush2.xpose.msra.mxu0 0.0
  %63 = vmatprep.subr.mxu0 0.0
  %64 = vmatpush2.xpose.msra.mxu0 0.0
  %65 = vmatprep.subr.mxu0 0.0
  %66 = vmatpush2.xpose.msra.mxu0 0.0
  %67 = vmatprep.subr.mxu0 0.0
  %68 = vmatpush2.xpose.msra.mxu0 0.0
  %69 = vmatprep.subr.mxu0 0.0
  %70 = vmatpush2.xpose.msra.mxu0 0.0
  %71 = vmatprep.subr.mxu0 0.0
  %72 = vmatpush2.xpose.msra.mxu0 0.0
  %73 = vmatprep.subr.mxu0 0.0
  %74 = vmatpush2.xpose.msra.mxu0 0.0
  %75 = vmatprep.subr.mxu0 0.0
  %76 = vmatpush2.xpose.msra.mxu0 0.0
  %77 = vmatprep.subr.mxu0 0.0
  %78 = vmatpush2.xpose.msra.mxu0 0.0
  %79 = vmatprep.subr.mxu0 0.0
  %80 = vmatpush2.xpose.msra.mxu0 0.0
  %81 = vmatprep.subr.mxu0 0.0
  %82 = vmatpush2.xpose.msra.mxu0 0.0
  %83 = vmatprep.subr.mxu0 0.0
  %84 = vmatpush2.xpose.msra.mxu0 0.0
  %85 = vmatprep.subr.mxu0 0.0
  %86 = vmatpush2.xpose.msra.mxu0 0.0
  %87 = vmatprep.subr.mxu0 0.0
  %88 = vmatpush2.xpose.msra.mxu0 0.0
  %89 = vmatprep.subr.mxu0 0.0
  %90 = vmatpush2.xpose.msra.mxu0 0.0
  %91 = vmatprep.subr.mxu0 0.0
  %92 = vmatpush2.xpose.msra.mxu0 0.0
  %93 = vmatprep.mubr.f32.mxu0 0.0
  %94 = vmatmul.mubr.f32.gmra.mxu0 %v25
  %v95 = vpop.f32.mrf.mxu0
  %v96 = vadd.f32 0.0, %v95
  %v97 = vpop.f32.mrf.mxu0
  %98 = vdwg.mxu0
  %v99 = vld [vmem:[%s1] sm:$0xff]
  %100 = vmatprep.subr.mxu0 0.0
  %101 = vmatpush1.xpose.msra.mxu0 0.0
  %102 = vmatprep.subr.mxu0 0.0
  %103 = vmatpush1.xpose.msra.mxu0 0.0
  %104 = vmatprep.subr.mxu0 0.0
  %105 = vmatpush1.xpose.msra.mxu0 0.0
  %106 = vmatprep.subr.mxu0 0.0
  %107 = vmatpush1.xpose.msra.mxu0 0.0
  %108 = vmatprep.subr.mxu0 0.0
  %109 = vmatpush1.xpose.msra.mxu0 0.0
  %110 = vmatprep.subr.mxu0 0.0
  %111 = vmatpush1.xpose.msra.mxu0 0.0
  %112 = vmatprep.subr.mxu0 0.0
  %113 = vmatpush1.xpose.msra.mxu0 0.0
  %114 = vmatprep.subr.mxu0 0.0
  %115 = vmatpush1.xpose.msra.mxu0 0.0
  %116 = vmatprep.subr.mxu0 0.0
  %117 = vmatpush1.xpose.msra.mxu0 0.0
  %118 = vmatprep.subr.mxu0 0.0
  %119 = vmatpush1.xpose.msra.mxu0 0.0
  %120 = vmatprep.subr.mxu0 0.0
  %121 = vmatpush1.xpose.msra.mxu0 0.0
  %122 = vmatprep.subr.mxu0 0.0
  %123 = vmatpush1.xpose.msra.mxu0 0.0
  %124 = vmatprep.subr.mxu0 0.0
  %125 = vmatpush1.xpose.msra.mxu0 0.0
  %126 = vmatprep.subr.mxu0 0.0
  %127 = vmatpush1.xpose.msra.mxu0 0.0
  %128 = vmatprep.subr.mxu0 0.0
  %129 = vmatpush1.xpose.msra.mxu0 0.0
  %130 = vmatprep.subr.mxu0 0.0
  %131 = vmatpush1.xpose.msra.mxu0 %v99
  %132 = vmatprep.subr.mxu0 0.0
  %133 = vmatpush2.xpose.msra.mxu0 0.0
  %134 = vmatprep.subr.mxu0 0.0
  %135 = vmatpush2.xpose.msra.mxu0 0.0
  %136 = vmatprep.subr.mxu0 0.0
  %137 = vmatpush2.xpose.msra.mxu0 0.0
  %138 = vmatprep.subr.mxu0 0.0
  %139 = vmatpush2.xpose.msra.mxu0 0.0
  %140 = vmatprep.subr.mxu0 0.0
  %141 = vmatpush2.xpose.msra.mxu0 0.0
  %142 = vmatprep.subr.mxu0 0.0
  %143 = vmatpush2.xpose.msra.mxu0 0.0
  %144 = vmatprep.subr.mxu0 0.0
  %145 = vmatpush2.xpose.msra.mxu0 0.0
  %146 = vmatprep.subr.mxu0 0.0
  %147 = vmatpush2.xpose.msra.mxu0 0.0
  %148 = vmatprep.subr.mxu0 0.0
  %149 = vmatpush2.xpose.msra.mxu0 0.0
  %150 = vmatprep.subr.mxu0 0.0
  %151 = vmatpush2.xpose.msra.mxu0 0.0
  %152 = vmatprep.subr.mxu0 0.0
  %153 = vmatpush2.xpose.msra.mxu0 0.0
  %154 = vmatprep.subr.mxu0 0.0
  %155 = vmatpush2.xpose.msra.mxu0 0.0
  %156 = vmatprep.subr.mxu0 0.0
  %157 = vmatpush2.xpose.msra.mxu0 0.0
  %158 = vmatprep.subr.mxu0 0.0
  %159 = vmatpush2.xpose.msra.mxu0 0.0
  %160 = vmatprep.subr.mxu0 0.0
  %161 = vmatpush2.xpose.msra.mxu0 0.0
  %162 = vmatprep.subr.mxu0 0.0
  %163 = vmatpush2.xpose.msra.mxu0 0.0
  %164 = vmatprep.mubr.f32.mxu0 0.0
  %165 = vmatmul.mubr.f32.gmra.mxu0 %v27
  %v166 = vpop.f32.mrf.mxu0
  %v167 = vadd.f32 0.0, %v166
  %v168 = vpop.f32.mrf.mxu0
  %169 = vdwg.mxu0
  %p170 = scmp.eq.s32.totalorder 0, 0
  // Predicated region
  $region26: #{tpu_custom_call.1} parent=0 // pred_check
    %p171 = pneg %p170
  $region27: #{tpu_custom_call.1} parent=0 // pred_check_branch
    %173 = sbr.rel (%p171) target = $region29
  $region28: #{tpu_custom_call.1} parent=0 // pred_region
    %vm174 = vcmask 64512
    %175 = vst.msk [vmem:[#allocation2] sm:$0xff] %vm174, %v96
    %176 = vst.msk [vmem:[#allocation3] sm:$0xff] %vm174, %v167
  $region29: #{tpu_custom_call.1} parent=0 // pred_fallthru
    _
  %p177 = scmp.ne.s32.totalorder 0, 0
  // Predicated region
  $region30: #{tpu_custom_call.1} parent=0 // pred_check
    %p178 = pneg %p177
  $region31: #{tpu_custom_call.1} parent=0 // pred_check_branch
    %180 = sbr.rel (%p178) target = $region33
  $region32: #{tpu_custom_call.1} parent=0 // pred_region
    %v181 = vld [vmem:[#allocation2] sm:$0xff]
    %v182 = vadd.f32 %v181, %v96
    %vm183 = vcmask 64512
    %184 = vst.msk [vmem:[#allocation2] sm:$0xff] %vm183, %v182
    %v185 = vld [vmem:[#allocation3] sm:$0xff]
    %v186 = vadd.f32 %v185, %v167
    %187 = vst.msk [vmem:[#allocation3] sm:$0xff] %vm183, %v186
  $region33: #{tpu_custom_call.1} parent=0 // pred_fallthru
    _
  // Predicated region
  $region34: #{tpu_custom_call.1} parent=0 // pred_check
    %p188 = pneg %p170
  $region35: #{tpu_custom_call.1} parent=0 // pred_check_branch
    %190 = sbr.rel (%p188) target = $region37
  $region36: #{tpu_custom_call.1} parent=0 // pred_region
    %v191 = vld [vmem:[%s2] sm:$0xff]
    %v192 = vmax.f32 %v191, 1e-08
    %v193 = vrsqrt.pop %v192
    %v194 = vld [vmem:[%s3] sm:$0xff]
    %v195 = vmax.f32 %v194, 1e-08
    %v196 = vrsqrt.pop %v195
    %v197 = vld [vmem:[%s4] sm:$0x1]
    %v198 = vmax.f32 %v197, 1e-08
    %v199 = vrsqrt.pop %v198
    %v200 = vld [vmem:[%s5] sm:$0x1]
    %v201 = vmax.f32 %v200, 1e-08
    %v202 = vrsqrt.pop %v201
    %v203 = vlaneseq
    %v204 = vand.u32 %v203, 127
    %v205 = vlaneseq
    %v206 = vshrl.u32 %v205, 7
    %v207 = vstv %s23
    %v208 = vadd.s32 %v207, %v206
    %vm209 = vcmp.eq.s32.totalorder %v204, %v208
    %vm210 = vcmp.ge.s32.totalorder %v204, 8
    %vm211 = vmor %vm209, %vm210
    %v212 = vld [vmem:[#allocation2] sm:$0xff]
    %214 = vset.pattern.permute.xlu0 0
    %215 = vperm.xlu0 %214, %v193
    %v216 = vpop.permute.xlu0 %215
    %v218 = vmul.f32 %v212, %v216
    %v220 = vlaneseq
    %v221 = vshrl.u32 %v220, 7
    %v222 = vsub.s32 0, %v221
    %v223 = vrot.slane %v199, %v222
    %v225 = vmul.f32 %v218, %v223
    %v226 = vsel %vm211, -3e+38, %v225
    %v227 = vld [vmem:[#allocation3] sm:$0xff]
    %229 = vset.pattern.permute.xlu0 0
    %230 = vperm.xlu0 %229, %v196
    %v231 = vpop.permute.xlu0 %230
    %v233 = vmul.f32 %v227, %v231
    %v235 = vlaneseq
    %v236 = vshrl.u32 %v235, 7
    %v237 = vsub.s32 0, %v236
    %v238 = vrot.slane %v202, %v237
    %v240 = vmul.f32 %v233, %v238
    %v241 = vsel %vm211, -3e+38, %v240
    loop: start=0, step=1, limit=5
    $region38: #{tpu_custom_call.1} parent=36 // loop_pre_header
      _
    $region39: #{tpu_custom_call.1} parent=36 // loop_header
      %s243 = sphi 0, %s247
      %p244 = scmp.ge.s32.totalorder %s243, 5
      %v248 = vphi %v241, %v283
      %v249 = vphi 0.0, %v282
    $region40: #{tpu_custom_call.1} parent=36 // loop_header_branch
      %246 = sbr.rel (%p244) target = $region44
    $region41: #{tpu_custom_call.1} parent=36 // loop_body
      %vm250 = vcmask 64512
      %v251 = vsel %vm250, %v248, -inf
      %252 = vmax.xlane.f32.xlu0 %v251
      %v253 = vpop.xlane.xlu0 %252
      %vm254 = vcmp.eq.f32.partialorder %v248, %v253
      %v255 = vsel %vm254, %v204, 8
      %v256 = vsel %vm250, %v255, 2147483647
      %v257 = vand.u32 %v256, 65535
      %v258 = vshra.s32 %v256, 16
      %v259 = vcvt.s32.f32 %v257
      %v260 = vcvt.s32.f32 %v258
      %261 = vmin.xlane.f32.xlu0 %v260
      %v262 = vpop.xlane.xlu0 %261
      %vm263 = vcmp.eq.f32.partialorder %v260, %v262
      %v264 = vsel %vm263, %v259, inf
      %265 = vmin.xlane.f32.xlu0 %v264
      %v266 = vpop.xlane.xlu0 %265
      %v267 = vcvt.f32.s32 %v266
      %v268 = vcvt.f32.s32 %v262
      %v269 = vshll.u32 %v268, 16
      %v270 = vadd.s32 %v269, %v267
      %vm271 = vcmp.eq.s32.totalorder %v204, %v270
      %vm272 = vcmp.gt.f32.partialorder %v253, -1.5e+38
      %v273 = vsel %vm272, 1, 0
      %vm274 = vcmp.eq.s32.totalorder %v273, 1
      %vm275 = vmand %vm271, %vm274
      %v276 = vsub.f32 %v226, %v253
      %v277 = vsel %vm275, %v276, 0.0
      %v278 = vmul.f32 %v277, %v277
      %v279 = vsel %vm250, %v278, 0.0
      %280 = vadd.xlane.f32.xlu0 %v279
      %v281 = vpop.xlane.xlu0 %280
      %v282 = vadd.f32 %v249, %v281
      %v283 = vsel %vm271, -3e+38, %v248
    $region42: #{tpu_custom_call.1} parent=36 // loop_footer
      %s247 = sadd.s32 1, %s243
    $region43: #{tpu_custom_call.1} parent=36 // loop_footer_branch
      %242 = sbr.rel target = $region39
    $region44: #{tpu_custom_call.1} parent=36 // loop_exit
      _
    %vm284 = vcmask 7168
    %285 = vst.msk [vmem:[%s6] sm:$0xff] %vm284, %v249
  $region37: #{tpu_custom_call.1} parent=0 // pred_fallthru
    _
  // Predicated region
  $region45: #{tpu_custom_call.1} parent=0 // pred_check
    _
  $region46: #{tpu_custom_call.1} parent=0 // pred_check_branch
    %287 = sbr.rel (0) target = $region48
  $region47: #{tpu_custom_call.1} parent=0 // pred_region
    _
  $region48: #{tpu_custom_call.1} parent=0 // pred_fallthru
    _
  // Predicated region
  $region49: #{tpu_custom_call.1} parent=0 // pred_check
    _
  $region50: #{tpu_custom_call.1} parent=0 // pred_check_branch
    %289 = sbr.rel (0) target = $region52
  $region51: #{tpu_custom_call.1} parent=0 // pred_region
    _
  $region52: #{tpu_custom_call.1} parent=0 // pred_fallthru
    _

</llo_original>
